<compile_context>
chip_gen: v7x
topology: tpu7x:2x2x1
jax: 0.10.0
libtpu: 0.0.40
codegen_flags: <defaults>
</compile_context>

<pallas_src>
import jax
import jax.numpy as jnp
from jax.experimental import pallas as pl
from jax.experimental.pallas import tpu as pltpu


def _cdiv(a, b):
    return -(-a // b)


def _round_up(x, m):
    return _cdiv(x, m) * m


def _tpu_tile_defaults():
    """Chip-dependent tile targets and VMEM limit."""
    kind = ""
    try:
        kind = jax.devices()[0].device_kind.lower()
    except Exception:
        pass
    if "v5 lite" in kind or "v5e" in kind or "v5litepod" in kind:
        # v5e: ~240 flop/byte compute:HBM ratio -> 512x512 tiles reach roofline.
        return {"tm": 512, "tn": 512, "tk": 1024, "vmem": 100 << 20}
    if "v6" in kind or "trillium" in kind:
        # v6e: needs ~655 flop/byte -> ~1536 output tiles; 128 MiB physical VMEM.
        return {"tm": 1536, "tn": 1536, "tk": 1024, "vmem": 100 << 20}
    if "v4" in kind or "v5p" in kind or "v5" in kind:
        return {"tm": 512, "tn": 512, "tk": 1024, "vmem": 100 << 20}
    # v7x / unknown: 64 MiB VMEM per TensorCore -> conservative limit + 1024 tiles.
    return {"tm": 1024, "tn": 1024, "tk": 1024, "vmem": 48 << 20}


def _middle_layer_kernel(x_ref, w_ref, b_ref, o_ref):
    """One (tm, tn) output tile, resident across the K grid axis.

    k==0 initializes the f32 output block with the broadcast bias; every K
    step accumulates a bf16 MXU matmul into it (f32 accumulation).
    """
    k = pl.program_id(2)

    @pl.when(k == 0)
    def _():
        o_ref[...] = jnp.broadcast_to(
            b_ref[...].astype(jnp.float32), o_ref.shape
        )

    o_ref[...] += jnp.dot(
        x_ref[...], w_ref[...], preferred_element_type=jnp.float32
    )


def _tiled_linear(x2d, w, b2d, *, tm_target=None, tn_target=None,
                  tk_target=None, vmem_limit=None):
    """y = x2d @ w + b2d (f32 result) with a tiled, pipelined Pallas matmul."""
    M, K = x2d.shape
    K2, N = w.shape
    assert K == K2, (K, K2)

    defaults = _tpu_tile_defaults()
    tm_target = tm_target or defaults["tm"]
    tn_target = tn_target or defaults["tn"]
    tk_target = tk_target or defaults["tk"]
    vmem_limit = vmem_limit or defaults["vmem"]

    # Alignment: sublane multiple depends on dtype packing; lane multiple is 128.
    sub = 16 if x2d.dtype == jnp.bfloat16 else 8
    m_al = _round_up(M, sub)
    k_al = _round_up(K, 128)
    n_al = _round_up(N, 128)

    tm = min(tm_target, m_al)
    tk = min(tk_target, k_al)
    tn = min(tn_target, n_al)

    # Megacore (v7x) guard: if the whole output is a single tile, split the
    # larger spatial axis so both TensorCores get a parallel grid point.
    if _cdiv(m_al, tm) * _cdiv(n_al, tn) == 1:
        if n_al >= 2 * 128:
            tn = _round_up(_cdiv(n_al, 2), 128)
        elif m_al >= 2 * sub:
            tm = _round_up(_cdiv(m_al, 2), sub)

    m_p = _round_up(M, tm)
    k_p = _round_up(K, tk)
    n_p = _round_up(N, tn)

    # Pad only if needed (zero K-padding is sum-neutral).
    if (m_p, k_p) != (M, K):
        x2d = jnp.pad(x2d, ((0, m_p - M), (0, k_p - K)))
    if (k_p, n_p) != (K, N):
        w = jnp.pad(w, ((0, k_p - K), (0, n_p - N)))
    if n_p != N:
        b2d = jnp.pad(b2d, ((0, 0), (0, n_p - N)))

    gm, gn, gk = m_p // tm, n_p // tn, k_p // tk

    # Truthful HBM traffic estimate including blocking re-reads.
    x_bytes = m_p * k_p * x2d.dtype.itemsize
    w_bytes = k_p * n_p * w.dtype.itemsize
    b_bytes = n_p * b2d.dtype.itemsize
    out_bytes = m_p * n_p * 4  # f32 output
    bytes_accessed = x_bytes * gn + w_bytes * gm + b_bytes * gm + out_bytes

    out_p = pl.pallas_call(
        _middle_layer_kernel,
        out_shape=jax.ShapeDtypeStruct((m_p, n_p), jnp.float32),
        grid_spec=pltpu.PrefetchScalarGridSpec(
            num_scalar_prefetch=0,
            grid=(gm, gn, gk),
            in_specs=[
                pl.BlockSpec((tm, tk), lambda i, j, k: (i, k)),
                pl.BlockSpec((tk, tn), lambda i, j, k: (k, j)),
                pl.BlockSpec((1, tn), lambda i, j, k: (0, j)),
            ],
            out_specs=pl.BlockSpec((tm, tn), lambda i, j, k: (i, j)),
        ),
        compiler_params=pltpu.CompilerParams(
            dimension_semantics=("parallel", "parallel", "arbitrary"),
            vmem_limit_bytes=vmem_limit,
        ),
        cost_estimate=pl.CostEstimate(
            flops=2 * m_p * n_p * k_p,
            transcendentals=0,
            bytes_accessed=bytes_accessed,
        ),
    )(x2d, w, b2d)

    return out_p[:M, :N]


def middle_layer_forward(features, parameters, *, compute_dtype=jnp.bfloat16,
                         force_pallas=False):
    """features: [batch, seq, hidden_in]; parameters: {'weight': [K, N], 'bias': [N]}.

    bf16 MXU inputs with in-kernel f32 accumulation by default. Tiny problems
    fall back to a fused XLA dot unless force_pallas=True.
    """
    w = parameters["weight"]
    b = parameters["bias"]

    batch, seq, hidden_in = features.shape
    hidden_out = w.shape[1]

    x2d = features.reshape(batch * seq, hidden_in)
    b2d = b.reshape(1, hidden_out).astype(jnp.float32)

    M, K, N = batch * seq, hidden_in, hidden_out
    if not force_pallas and (M * K * N) < (1 << 21):
        # Small-shape fallback: padding + grid-step overhead would dominate.
        out2d = jnp.dot(x2d, w, preferred_element_type=jnp.float32) + b2d
        return out2d.reshape(batch, seq, hidden_out).astype(features.dtype)

    if compute_dtype is not None:
        x2d = x2d.astype(compute_dtype)
        w = w.astype(compute_dtype)

    out2d = _tiled_linear(x2d, w, b2d)
    return out2d.reshape(batch, seq, hidden_out).astype(features.dtype)


def dense_middle_layer(_ctor_parameters):
    """The concrete `layer(parameters)` factory wrapped by MiddleLayer."""
    def forward(features, parameters):
        return middle_layer_forward(features, parameters, force_pallas=True)
    return forward


class MiddleLayer:
    """Mirrors the PyTorch MiddleLayer wrapper semantics."""

    def __init__(self, layer, parameters):
        self.middle_layer = layer(parameters)

    def __str__(self):
        return f"Middle Layer Name : {self.middle_layer}"

    def __call__(self, features, parameters):
        return self.middle_layer(features, parameters)


if __name__ == "__main__":
    key = jax.random.PRNGKey(0)
    k_feat, k_w, k_b, k_feat2, k_w2, k_b2 = jax.random.split(key, 6)

    # ---- Case 1: small shapes from the module spec, forced through Pallas ----
    batch, seq, hidden = 2, 8, 32
    features = jax.random.normal(k_feat, (batch, seq, hidden), dtype=jnp.float32)
    parameters = {
        "weight": jax.random.normal(k_w, (hidden, hidden), dtype=jnp.float32) * 0.02,
        "bias": jax.random.normal(k_b, (hidden,), dtype=jnp.float32) * 0.01,
    }

    module = MiddleLayer(dense_middle_layer, parameters)
    out = module(features, parameters)
    out = jax.block_until_ready(out)
    assert out.shape == (batch, seq, hidden)

    # Reference with the same bf16 input precision (f32 accumulation).
    xb = features.reshape(-1, hidden).astype(jnp.bfloat16)
    wb = parameters["weight"].astype(jnp.bfloat16)
    ref_bf16 = (jnp.dot(xb, wb, preferred_element_type=jnp.float32)
                + parameters["bias"]).reshape(batch, seq, hidden)
    assert jnp.allclose(out, ref_bf16, atol=1e-2, rtol=1e-2)

    # Small-shape fallback path (plain XLA dot) — tight f32 check.
    out_fb = middle_layer_forward(features, parameters, force_pallas=False)
    out_fb = jax.block_until_ready(out_fb)
    ref_f32 = (features.reshape(-1, hidden) @ parameters["weight"]
               + parameters["bias"]).reshape(batch, seq, hidden)
    assert jnp.allclose(out_fb, ref_f32, atol=1e-5, rtol=1e-5)

    # ---- Case 2: multi-tile grid (K accumulation + N tiling + N padding) ----
    b2, s2, kin, kout = 2, 64, 2048, 384
    features2 = jax.random.normal(k_feat2, (b2, s2, kin), dtype=jnp.float32)
    parameters2 = {
        "weight": jax.random.normal(k_w2, (kin, kout), dtype=jnp.float32) * 0.02,
        "bias": jax.random.normal(k_b2, (kout,), dtype=jnp.float32) * 0.01,
    }
    out2 = middle_layer_forward(features2, parameters2)
    out2 = jax.block_until_ready(out2)
    assert out2.shape == (b2, s2, kout)

    xb2 = features2.reshape(-1, kin).astype(jnp.bfloat16)
    wb2 = parameters2["weight"].astype(jnp.bfloat16)
    ref2 = (jnp.dot(xb2, wb2, preferred_element_type=jnp.float32)
            + parameters2["bias"]).reshape(b2, s2, kout)
    assert jnp.allclose(out2, ref2, atol=2e-2, rtol=2e-2)

    print("KERNEL_OK")
</pallas_src>

<mosaic_0001>
module attributes {stable_mosaic.version = 11 : i64} {
  func.func @_middle_layer_kernel(%arg0: i32, %arg1: i32, %arg2: i32, %arg3: memref<16x128xbf16, #tpu.memory_space<vmem>>, %arg4: memref<128x128xbf16, #tpu.memory_space<vmem>>, %arg5: memref<1x128xf32, #tpu.memory_space<vmem>>, %arg6: memref<16x128xf32, #tpu.memory_space<vmem>>) attributes {dimension_semantics = [#tpu.dimension_semantics<parallel>, #tpu.dimension_semantics<parallel>, #tpu.dimension_semantics<arbitrary>], iteration_bounds = array<i64: 1, 1, 1>, scalar_prefetch = 0 : i64, scratch_operands = 0 : i64, tpu.core_type = #tpu.core_type<tc>, window_params = [{transform_indices = @transform_0, window_bounds = array<i64: 16, 128>}, {transform_indices = @transform_1, window_bounds = array<i64: 128, 128>}, {transform_indices = @transform_2, window_bounds = array<i64: 1, 128>}, {transform_indices = @transform_3, window_bounds = array<i64: 16, 128>}]} {
    %c0_i32 = arith.constant 0 : i32
    %0 = arith.cmpi eq, %arg2, %c0_i32 : i32
    %1 = arith.extui %0 : i1 to i32
    %c0_i32_0 = arith.constant 0 : i32
    %2 = arith.cmpi ne, %1, %c0_i32_0 : i32
    scf.if %2 {
      %c0_8 = arith.constant 0 : index
      %c0_9 = arith.constant 0 : index
      %9 = vector.load %arg5[%c0_8, %c0_9] : memref<1x128xf32, #tpu.memory_space<vmem>>, vector<1x128xf32>
      %10 = vector.shape_cast %9 : vector<1x128xf32> to vector<1x128xf32>
      %11 = vector.broadcast %10 : vector<1x128xf32> to vector<16x128xf32>
      %c0_10 = arith.constant 0 : index
      %c0_11 = arith.constant 0 : index
      %12 = vector.load %arg6[%c0_10, %c0_11] : memref<16x128xf32, #tpu.memory_space<vmem>>, vector<16x128xf32>
      tpu.vector_store %arg6[%c0_10, %c0_11], %11 {strides = array<i32>} : memref<16x128xf32, #tpu.memory_space<vmem>>, vector<16x128xf32>,
    } else {
    }
    %c0 = arith.constant 0 : index
    %c0_1 = arith.constant 0 : index
    %3 = vector.load %arg6[%c0, %c0_1] : memref<16x128xf32, #tpu.memory_space<vmem>>, vector<16x128xf32>
    %c0_2 = arith.constant 0 : index
    %c0_3 = arith.constant 0 : index
    %4 = vector.load %arg3[%c0_2, %c0_3] : memref<16x128xbf16, #tpu.memory_space<vmem>>, vector<16x128xbf16>
    %c0_4 = arith.constant 0 : index
    %c0_5 = arith.constant 0 : index
    %5 = vector.load %arg4[%c0_4, %c0_5] : memref<128x128xbf16, #tpu.memory_space<vmem>>, vector<128x128xbf16>
    %cst = arith.constant dense<0.000000e+00> : vector<16x128xf32>
    %6 = tpu.matmul %4, %5, %cst {dimension_numbers = #tpu.dot_dimension_numbers<[1], [0], [0], [1], [0, 0, 1, 1], [], []>} : vector<16x128xbf16>, vector<128x128xbf16>, vector<16x128xf32> -> vector<16x128xf32>
    %7 = arith.addf %3, %6 : vector<16x128xf32>
    %c0_6 = arith.constant 0 : index
    %c0_7 = arith.constant 0 : index
    %8 = vector.load %arg6[%c0_6, %c0_7] : memref<16x128xf32, #tpu.memory_space<vmem>>, vector<16x128xf32>
    tpu.vector_store %arg6[%c0_6, %c0_7], %7 {strides = array<i32>} : memref<16x128xf32, #tpu.memory_space<vmem>>, vector<16x128xf32>,
    return
  }
  func.func @transform_0(%arg0: i32, %arg1: i32, %arg2: i32) -> (i32, i32) {
    %c0_i32 = arith.constant 0 : i32
    return %arg0, %arg2 : i32, i32
  }
  func.func @transform_1(%arg0: i32, %arg1: i32, %arg2: i32) -> (i32, i32) {
    %c0_i32 = arith.constant 0 : i32
    return %arg2, %arg1 : i32, i32
  }
  func.func @transform_2(%arg0: i32, %arg1: i32, %arg2: i32) -> (i32, i32) {
    %c0_i32 = arith.constant 0 : i32
    %c0_i32_0 = arith.constant 0 : i32
    return %c0_i32, %arg1 : i32, i32
  }
  func.func @transform_3(%arg0: i32, %arg1: i32, %arg2: i32) -> (i32, i32) {
    %c0_i32 = arith.constant 0 : i32
    return %arg0, %arg1 : i32, i32
  }
}

</mosaic_0001>

<llo_original>
// kernel: tpu_custom_call.1
$region0: #{tpu_custom_call.1}
  #allocation0 [shape = 'u32[]', space=smem, size = 0x4, offset = 0x4, fixed_abs, tag = 'smem constant byte address 0x4 - core index']
  #allocation1 [shape = 'u32[144,128]{1,0:T(1,128)}', space=vmem, size = 0x12000, scoped, tag = 'internal scratch']
  %s0 = inlined_call_operand.hbm [shape: bf16[16,128], index: 0, kind: input, shape index: {}]
  %s1 = inlined_call_operand.hbm [shape: bf16[128,128], index: 1, kind: input, shape index: {}]
  %s2 = inlined_call_operand.vmem [shape: f32[1,128], index: 2, kind: input, shape index: {}]
  %s3 = inlined_call_operand.hbm [shape: f32[16,128], index: 3, kind: output, shape index: {}]
  %s4 = sld [smem:[#allocation0]]
  $region34: #{tpu_custom_call.1} parent=0
    _
  %s6 = ssub.s32 1, %s4
  %s7 = scalar_select 0, %s6, %s4
  $region1: #{tpu_custom_call.1} parent=0
    #allocation2 [shape = 'u8[4096]{0}', space=vmem, size = 0x1000, scoped, tag = 'input window, operand 0, single buffered']
    #allocation3 [shape = 's32[1]{0}', space=sflag, size = 0x4, scoped, tag = 'scoped memory for tpu_custom_call.1']
    #allocation4 [shape = 's32[1]{0}', space=sflag, size = 0x4, scoped, tag = 'scoped memory for tpu_custom_call.1']
    #allocation5 [shape = 'u8[32768]{0}', space=vmem, size = 0x8000, scoped, tag = 'input window, operand 1, single buffered']
    #allocation6 [shape = 's32[1]{0}', space=sflag, size = 0x4, scoped, tag = 'scoped memory for tpu_custom_call.1']
    #allocation7 [shape = 'u8[8192]{0}', space=vmem, size = 0x2000, scoped, tag = 'output window, operand 0, single buffered']
    %8 = vsyncpa [#allocation3], 0
    %9 = vsyncpa [#allocation6], 0
    %10 = vsyncpa [#allocation4], 0
    // Predicated region
    $region2: #{tpu_custom_call.1} parent=1 // pred_check
      _
    $region3: #{tpu_custom_call.1} parent=1 // pred_check_branch
      %12 = sbr.rel (0) target = $region5
    $region4: #{tpu_custom_call.1} parent=1 // pred_region
      %s14 = ssub.s32 128, 128
      %15 = vsyncadd [#allocation3], %s14
      %s16 = sshll.u32 [#allocation2], 4
      %s17 = int_to_ptr.vmem [resolvable:$true] %s16
      %22 = dma.hbm_to_vmem [thread:$0]  %s0, 128, %s17, [#allocation3], 64, 64, 4
    $region5: #{tpu_custom_call.1} parent=1 // pred_fallthru
      _
    // Predicated region
    $region6: #{tpu_custom_call.1} parent=1 // pred_check
      _
    $region7: #{tpu_custom_call.1} parent=1 // pred_check_branch
      %24 = sbr.rel (0) target = $region9
    $region8: #{tpu_custom_call.1} parent=1 // pred_region
      %s26 = ssub.s32 1024, 1024
      %27 = vsyncadd [#allocation6], %s26
      %s28 = sshll.u32 [#allocation5], 4
      %s29 = int_to_ptr.vmem [resolvable:$true] %s28
      %34 = dma.hbm_to_vmem [thread:$0]  %s1, 1024, %s29, [#allocation6], 64, 64, 4
    $region9: #{tpu_custom_call.1} parent=1 // pred_fallthru
      _
    // Predicated region
    $region10: #{tpu_custom_call.1} parent=1 // pred_check
      _
    $region11: #{tpu_custom_call.1} parent=1 // pred_check_branch
      %36 = sbr.rel (0) target = $region13
    $region12: #{tpu_custom_call.1} parent=1 // pred_region
      _
    $region13: #{tpu_custom_call.1} parent=1 // pred_fallthru
      _
    // Predicated region
    $region14: #{tpu_custom_call.1} parent=1 // pred_check
      _
    $region15: #{tpu_custom_call.1} parent=1 // pred_check_branch
      %38 = sbr.rel (0) target = $region17
    $region16: #{tpu_custom_call.1} parent=1 // pred_region
      %39 = dma.done [#allocation3], 128
    $region17: #{tpu_custom_call.1} parent=1 // pred_fallthru
      _
    // Predicated region
    $region18: #{tpu_custom_call.1} parent=1 // pred_check
      _
    $region19: #{tpu_custom_call.1} parent=1 // pred_check_branch
      %41 = sbr.rel (0) target = $region21
    $region20: #{tpu_custom_call.1} parent=1 // pred_region
      %42 = dma.done [#allocation6], 1024
    $region21: #{tpu_custom_call.1} parent=1 // pred_fallthru
      _
    %p44 = scmp.eq.s32.totalorder 0, 0
    // Predicated region
    $region22: #{tpu_custom_call.1} parent=1 // pred_check
      %p45 = pneg %p44
    $region23: #{tpu_custom_call.1} parent=1 // pred_check_branch
      %47 = sbr.rel (%p45) target = $region25
    $region24: #{tpu_custom_call.1} parent=1 // pred_region
      %v48 = vld [vmem:[%s2] sm:$0x1]
      %v50 = vlaneseq
      %v51 = vshrl.u32 %v50, 7
      %v52 = vsub.s32 0, %v51
      %v53 = vrot.slane %v48, %v52
      %55 = vst [vmem:[#allocation7] sm:$0xff] %v53
      %56 = vst [vmem:[#allocation7 + $0x8] sm:$0xff] %v53
    $region25: #{tpu_custom_call.1} parent=1 // pred_fallthru
      _
    %v57 = vld [vmem:[#allocation7] sm:$0xff]
    %v58 = vld [vmem:[#allocation7 + $0x8] sm:$0xff]
    %v59 = vld [vmem:[#allocation2] sm:$0xf]
    %v60 = vld [vmem:[#allocation2 + $0x4] sm:$0xf]
    %v61 = vld [vmem:[#allocation5] sm:$0xf]
    %v62 = vld [vmem:[#allocation5 + $0x4] sm:$0xf]
    %v63 = vld [vmem:[#allocation5 + $0x8] sm:$0xf]
    %v64 = vld [vmem:[#allocation5 + $0xc] sm:$0xf]
    %v65 = vld [vmem:[#allocation5 + $0x10] sm:$0xf]
    %v66 = vld [vmem:[#allocation5 + $0x14] sm:$0xf]
    %v67 = vld [vmem:[#allocation5 + $0x18] sm:$0xf]
    %v68 = vld [vmem:[#allocation5 + $0x1c] sm:$0xf]
    %v69 = vld [vmem:[#allocation5 + $0x20] sm:$0xf]
    %v70 = vld [vmem:[#allocation5 + $0x24] sm:$0xf]
    %v71 = vld [vmem:[#allocation5 + $0x28] sm:$0xf]
    %v72 = vld [vmem:[#allocation5 + $0x2c] sm:$0xf]
    %v73 = vld [vmem:[#allocation5 + $0x30] sm:$0xf]
    %v74 = vld [vmem:[#allocation5 + $0x34] sm:$0xf]
    %v75 = vld [vmem:[#allocation5 + $0x38] sm:$0xf]
    %v76 = vld [vmem:[#allocation5 + $0x3c] sm:$0xf]
    %v79 = vunpack.c.l.b16 %v59
    %v80 = vunpack.c.l.b16 %v60
    %v81 = vpack.c.b16 %v80, %v79
    %v99 = vunpack.c.l.b16 %v61
    %v100 = vunpack.c.l.b16 %v62
    %v101 = vunpack.c.l.b16 %v63
    %v102 = vunpack.c.l.b16 %v64
    %v103 = vunpack.c.l.b16 %v65
    %v104 = vunpack.c.l.b16 %v66
    %v105 = vunpack.c.l.b16 %v67
    %v106 = vunpack.c.l.b16 %v68
    %v107 = vunpack.c.l.b16 %v69
    %v108 = vunpack.c.l.b16 %v70
    %v109 = vunpack.c.l.b16 %v71
    %v110 = vunpack.c.l.b16 %v72
    %v111 = vunpack.c.l.b16 %v73
    %v112 = vunpack.c.l.b16 %v74
    %v113 = vunpack.c.l.b16 %v75
    %v114 = vunpack.c.l.b16 %v76
    %v115 = vpack.c.b16 %v100, %v99
    %v116 = vpack.c.b16 %v102, %v101
    %v117 = vpack.c.b16 %v104, %v103
    %v118 = vpack.c.b16 %v106, %v105
    %v119 = vpack.c.b16 %v108, %v107
    %v120 = vpack.c.b16 %v110, %v109
    %v121 = vpack.c.b16 %v112, %v111
    %v122 = vpack.c.b16 %v114, %v113
    %131 = vmatprep.subr.bf16.mxu0 0
    %132 = vmatpush1.bf16.msra.mxu0 %v115
    %133 = vmatprep.subr.bf16.mxu0 0
    %134 = vmatpush1.bf16.msra.mxu0 %v116
    %135 = vmatprep.subr.bf16.mxu0 0
    %136 = vmatpush1.bf16.msra.mxu0 %v117
    %137 = vmatprep.subr.bf16.mxu0 0
    %138 = vmatpush1.bf16.msra.mxu0 %v118
    %139 = vmatprep.subr.bf16.mxu0 0
    %140 = vmatpush1.bf16.msra.mxu0 %v119
    %141 = vmatprep.subr.bf16.mxu0 0
    %142 = vmatpush1.bf16.msra.mxu0 %v120
    %143 = vmatprep.subr.bf16.mxu0 0
    %144 = vmatpush1.bf16.msra.mxu0 %v121
    %145 = vmatprep.subr.bf16.mxu0 0
    %146 = vmatpush1.bf16.msra.mxu0 %v122
    %147 = vmatprep.subr.bf16.mxu0 0
    %148 = vmatpush1.bf16.msra.mxu0 0
    %149 = vmatprep.subr.bf16.mxu0 0
    %150 = vmatpush1.bf16.msra.mxu0 0
    %151 = vmatprep.subr.bf16.mxu0 0
    %152 = vmatpush1.bf16.msra.mxu0 0
    %153 = vmatprep.subr.bf16.mxu0 0
    %154 = vmatpush1.bf16.msra.mxu0 0
    %155 = vmatprep.subr.bf16.mxu0 0
    %156 = vmatpush1.bf16.msra.mxu0 0
    %157 = vmatprep.subr.bf16.mxu0 0
    %158 = vmatpush1.bf16.msra.mxu0 0
    %159 = vmatprep.subr.bf16.mxu0 0
    %160 = vmatpush1.bf16.msra.mxu0 0
    %161 = vmatprep.subr.bf16.mxu0 0
    %162 = vmatpush1.bf16.msra.mxu0 0
    %163 = vmatprep.mubr.bf16.mxu0 0
    %164 = vmatmul.mubr.bf16.gmra.mrb[0].mxu0 %v81
    %v165 = vpop.f32.mrb[0].mxu0
    %v166 = vadd.f32 0.0, %v165
    %v167 = vpop.f32.mrb[0].mxu0
    %v168 = vpop.f32.mrb[0].mxu0
    %v169 = vadd.f32 0.0, %v168
    %v170 = vpop.f32.mrb[0].mxu0
    %171 = vdwg.mxu0
    %v172 = vadd.f32 %v57, %v166
    %v173 = vadd.f32 %v58, %v169
    %174 = vst [vmem:[#allocation7] sm:$0xff] %v172
    %175 = vst [vmem:[#allocation7 + $0x8] sm:$0xff] %v173
    // Predicated region
    $region26: #{tpu_custom_call.1} parent=1 // pred_check
      _
    $region27: #{tpu_custom_call.1} parent=1 // pred_check_branch
      %177 = sbr.rel (0) target = $region29
    $region28: #{tpu_custom_call.1} parent=1 // pred_region
      %s179 = ssub.s32 256, 256
      %180 = vsyncadd [#allocation4], %s179
      %s181 = sshll.u32 [#allocation7], 4
      %s182 = int_to_ptr.vmem [resolvable:$true] %s181
      %187 = dma.vmem_to_hbm [thread:$0]  %s182, 256, %s3, [#allocation4], 128, 128, 8
    $region29: #{tpu_custom_call.1} parent=1 // pred_fallthru
      _
    // Predicated region
    $region30: #{tpu_custom_call.1} parent=1 // pred_check
      _
    $region31: #{tpu_custom_call.1} parent=1 // pred_check_branch
      %189 = sbr.rel (0) target = $region33
    $region32: #{tpu_custom_call.1} parent=1 // pred_region
      %190 = dma.done [#allocation4], 256
    $region33: #{tpu_custom_call.1} parent=1 // pred_fallthru
      _
    %191 = vsyncpa [#allocation3], 1
    %192 = vsyncpa [#allocation6], 1
    %193 = vsyncpa [#allocation4], 1

</llo_original>
